<compile_context>
chip_gen: v6e
topology: v6e:2x2x1
jax: 0.10.0
libtpu: 0.0.40
codegen_flags: <defaults>
</compile_context>

<pallas_src>
import functools

import jax
import jax.numpy as jnp
from jax.experimental import pallas as pl
from jax.experimental.pallas import tpu as pltpu


# --------------------------------- kernels ---------------------------------


def _fused_kernel(x_ref, w1t_ref, w2t_ref, out_ref, s_ref, *, seq_len):
    """Single pass per batch tile: mean over L + squeeze-excite + rescale."""
    x = x_ref[...]                                                    # (bt, C, L)
    y = jnp.sum(x.astype(jnp.float32), axis=-1) * (1.0 / seq_len)     # (bt, C)
    h = jnp.maximum(
        jnp.dot(y, w1t_ref[...], preferred_element_type=jnp.float32), 0.0)
    z = jnp.dot(h, w2t_ref[...], preferred_element_type=jnp.float32)  # (bt, C)
    s = jax.nn.sigmoid(z).astype(out_ref.dtype)
    s_ref[...] = s[:, :, None].astype(s_ref.dtype)
    out_ref[...] = x * s[:, :, None]                                  # broadcast over L


def _reduce_excite_kernel(x_ref, w1t_ref, w2t_ref, s_ref, acc_ref, *, seq_len, l_tile):
    """Two-pass phase 1: streaming mean over L + squeeze-excite per batch tile.

    Grid: (nb, nl); L is the reduction axis ("arbitrary", last).
    acc_ref: (b_tile, C, 1) f32 scratch -- each L tile is lane-reduced before
             accumulation, so the scratch is tiny and l_tile can grow.
    s_ref:   (b_tile, C, 1) output block, L-invariant index_map -> written once.
    """
    l = pl.program_id(1)
    nl = pl.num_programs(1)
    rem = seq_len % l_tile  # static python int

    @pl.when(l == 0)
    def _():
        acc_ref[...] = jnp.zeros_like(acc_ref)

    def _accumulate(mask_tail):
        x = x_ref[...].astype(jnp.float32)                            # (bt, C, lt)
        if mask_tail:
            offs = jax.lax.broadcasted_iota(jnp.int32, x.shape, 2)
            x = jnp.where(offs < rem, x, 0.0)
        acc_ref[...] += jnp.sum(x, axis=-1, keepdims=True)            # (bt, C, 1)

    if rem == 0:
        _accumulate(False)
    else:
        # Ragged L: only the last tile pays for the iota/compare/select mask.
        @pl.when(l < nl - 1)
        def _():
            _accumulate(False)

        @pl.when(l == nl - 1)
        def _():
            _accumulate(True)

    @pl.when(l == nl - 1)
    def _():
        y = acc_ref[...][:, :, 0] * (1.0 / seq_len)                   # (bt, C)
        h = jnp.maximum(
            jnp.dot(y, w1t_ref[...], preferred_element_type=jnp.float32), 0.0)
        z = jnp.dot(h, w2t_ref[...], preferred_element_type=jnp.float32)
        s_ref[...] = jax.nn.sigmoid(z)[:, :, None].astype(s_ref.dtype)


def _scale_kernel(s_ref, x_ref, out_ref):
    """Two-pass phase 2: hot streaming loop, out = x * s (s broadcast over L)."""
    out_ref[...] = x_ref[...] * s_ref[...]                            # (bt,C,lt)*(bt,C,1)


# --------------------------------- sizing ----------------------------------


def _vmem_budget_bytes():
    """Generation-aware scoped-VMEM budget (~3/4 of physical VMEM)."""
    phys = 64 << 20  # conservative default == v7x physical VMEM
    try:
        info = pltpu.get_tpu_info()
        phys = int(getattr(info, "vmem_capacity_bytes", phys))
    except Exception:
        pass
    return (phys * 3) // 4  # 48 MiB on v7x, 96 MiB on v5e/v6e


def _pick_b_tile(B, bt_cap):
    """Keep >= 2 grid steps along B when possible (v7x megacore, pipelining)."""
    if B <= 1:
        return 1
    want = -(-B // 2) if B <= 16 else 8
    return max(1, min(want, bt_cap))


def _pick_l_tile(L, b_tile, C, itemsize, tile_budget):
    """Largest 128-aligned L tile that keeps an x tile within tile_budget."""
    max_lanes = tile_budget // max(1, b_tile * C * itemsize)
    if max_lanes >= L:
        return L  # single full-extent tile (any L allowed)
    return max(128, (max_lanes // 128) * 128)


# --------------------------------- wrapper ---------------------------------


def ca_layer(x, w1, w2, *, l_tile=None, b_tile=None, force_two_pass=False,
             alias_x_to_out=False):
    """x: (B, C, L); w1: (C//r, C); w2: (C, C//r). Returns (x*y, y), y (B, C, 1)."""
    B, C, L = x.shape
    Cr = w1.shape[0]
    assert w1.shape == (Cr, C) and w2.shape == (C, Cr)

    # Pre-transpose the 1x1-conv weights so the in-kernel matmuls need no relayout.
    w1t = w1.T  # (C, Cr)
    w2t = w2.T  # (Cr, C)

    itemsize = jnp.dtype(x.dtype).itemsize
    budget = _vmem_budget_bytes()
    # ~1/6 of the budget per tile: 2x double-buffered in + 2x out + f32 temp + headroom.
    tile_budget = max(budget // 6, 1 << 20)

    row_bytes = C * L * itemsize
    bt_cap_fused = tile_budget // max(1, row_bytes)
    use_fused = (not force_two_pass) and (l_tile is None or l_tile == L) \
        and bt_cap_fused >= 1

    # ------------------ fused single pass: read x once, write once ------------------
    if use_fused:
        bt = b_tile if b_tile is not None else _pick_b_tile(B, bt_cap_fused)
        nb = pl.cdiv(B, bt)
        cost = pl.CostEstimate(
            flops=int(2 * B * C * L + 4 * B * C * Cr),
            transcendentals=int(B * C),
            bytes_accessed=int(2 * B * C * L * itemsize + B * C * itemsize),
        )
        out, s = pl.pallas_call(
            functools.partial(_fused_kernel, seq_len=L),
            out_shape=(jax.ShapeDtypeStruct((B, C, L), x.dtype),
                       jax.ShapeDtypeStruct((B, C, 1), x.dtype)),
            grid_spec=pltpu.PrefetchScalarGridSpec(
                num_scalar_prefetch=0,
                grid=(nb,),
                in_specs=[
                    pl.BlockSpec((bt, C, L), lambda b: (b, 0, 0)),
                    pl.BlockSpec((C, Cr), lambda b: (0, 0)),
                    pl.BlockSpec((Cr, C), lambda b: (0, 0)),
                ],
                out_specs=(pl.BlockSpec((bt, C, L), lambda b: (b, 0, 0)),
                           pl.BlockSpec((bt, C, 1), lambda b: (b, 0, 0))),
            ),
            compiler_params=pltpu.CompilerParams(
                dimension_semantics=("parallel",),
                vmem_limit_bytes=budget,
            ),
            cost_estimate=cost,
            input_output_aliases=({0: 0} if alias_x_to_out else {}),
        )(x, w1t, w2t)
        return out, s

    # ------------------ two-pass streaming fallback (very long L) -------------------
    bt = b_tile if b_tile is not None else _pick_b_tile(B, B)
    lt = l_tile if l_tile is not None else _pick_l_tile(L, bt, C, itemsize, tile_budget)
    assert lt == L or lt % 128 == 0, "l_tile must be a multiple of 128 or the full L"
    nb = pl.cdiv(B, bt)
    nl = pl.cdiv(L, lt)

    # Phase 1: mean over L (streamed) + squeeze-excite -> s (B, C, 1)
    reduce_cost = pl.CostEstimate(
        flops=int(B * C * L + 4 * B * C * Cr),
        transcendentals=int(B * C),
        bytes_accessed=int(B * C * L * itemsize + B * C * itemsize),
    )
    s = pl.pallas_call(
        functools.partial(_reduce_excite_kernel, seq_len=L, l_tile=lt),
        out_shape=jax.ShapeDtypeStruct((B, C, 1), x.dtype),
        grid_spec=pltpu.PrefetchScalarGridSpec(
            num_scalar_prefetch=0,
            grid=(nb, nl),
            in_specs=[
                pl.BlockSpec((bt, C, lt), lambda b, l: (b, 0, l)),
                pl.BlockSpec((C, Cr), lambda b, l: (0, 0)),
                pl.BlockSpec((Cr, C), lambda b, l: (0, 0)),
            ],
            out_specs=pl.BlockSpec((bt, C, 1), lambda b, l: (b, 0, 0)),
            scratch_shapes=[pltpu.VMEM((bt, C, 1), jnp.float32)],
        ),
        compiler_params=pltpu.CompilerParams(
            dimension_semantics=("parallel", "arbitrary"),
            vmem_limit_bytes=budget,
        ),
        cost_estimate=reduce_cost,
    )(x, w1t, w2t)

    # Phase 2: out = x * s (broadcast over L)
    scale_cost = pl.CostEstimate(
        flops=int(B * C * L),
        transcendentals=0,
        bytes_accessed=int(2 * B * C * L * itemsize + B * C * itemsize),
    )
    out = pl.pallas_call(
        _scale_kernel,
        out_shape=jax.ShapeDtypeStruct((B, C, L), x.dtype),
        grid_spec=pltpu.PrefetchScalarGridSpec(
            num_scalar_prefetch=0,
            grid=(nb, nl),
            in_specs=[
                pl.BlockSpec((bt, C, 1), lambda b, l: (b, 0, 0)),
                pl.BlockSpec((bt, C, lt), lambda b, l: (b, 0, l)),
            ],
            out_specs=pl.BlockSpec((bt, C, lt), lambda b, l: (b, 0, l)),
        ),
        compiler_params=pltpu.CompilerParams(
            dimension_semantics=("parallel", "parallel"),
            vmem_limit_bytes=budget,
        ),
        cost_estimate=scale_cost,
        input_output_aliases=({1: 0} if alias_x_to_out else {}),
    )(s, x)
    return out, s


def ca_layer_ref(x, w1, w2):
    """Pure-JAX reference of the PyTorch forward."""
    y = jnp.mean(x, axis=-1)                       # (B, C)
    h = jnp.maximum(y @ w1.T, 0.0)                 # (B, Cr)
    s = jax.nn.sigmoid(h @ w2.T)                   # (B, C)
    return x * s[:, :, None], s[:, :, None]


if __name__ == "__main__":
    # Small shapes consistent with the module: channel=32, reduction=4 -> hidden=8.
    B, C, L = 2, 32, 1024
    reduction = 4
    Cr = C // reduction

    key = jax.random.PRNGKey(0)
    kx, k1, k2 = jax.random.split(key, 3)
    x = jax.random.normal(kx, (B, C, L), dtype=jnp.float32)
    # PyTorch Conv1d(k=1, bias=False) weight (out_ch, in_ch, 1) -> squeeze kernel dim.
    w1 = jax.random.normal(k1, (Cr, C), dtype=jnp.float32) * (1.0 / jnp.sqrt(C))
    w2 = jax.random.normal(k2, (C, Cr), dtype=jnp.float32) * (1.0 / jnp.sqrt(Cr))

    out_ref, y_ref = ca_layer_ref(x, w1, w2)

    # 1) Fused single-pass path (default): (b_tile, C, L) slab fits VMEM.
    out, y = ca_layer(x, w1, w2)
    out = jax.block_until_ready(out)
    y = jax.block_until_ready(y)
    assert out.shape == (B, C, L) and y.shape == (B, C, 1)
    assert jnp.allclose(out, out_ref, atol=1e-5, rtol=1e-5)
    assert jnp.allclose(y, y_ref, atol=1e-5, rtol=1e-5)

    # 2) Two-pass streaming fallback with exact L tiling (no mask path).
    out2, y2 = ca_layer(x, w1, w2, force_two_pass=True, l_tile=256)
    out2 = jax.block_until_ready(out2)
    y2 = jax.block_until_ready(y2)
    assert jnp.allclose(out2, out_ref, atol=1e-5, rtol=1e-5)
    assert jnp.allclose(y2, y_ref, atol=1e-5, rtol=1e-5)

    # 3) Two-pass with a ragged last L tile (exercises the tail-only mask).
    out3, y3 = ca_layer(x, w1, w2, force_two_pass=True, l_tile=384)
    out3 = jax.block_until_ready(out3)
    y3 = jax.block_until_ready(y3)
    assert jnp.allclose(out3, out_ref, atol=1e-5, rtol=1e-5)
    assert jnp.allclose(y3, y_ref, atol=1e-5, rtol=1e-5)

    print("KERNEL_OK")
</pallas_src>

<mosaic_0001>
module attributes {stable_mosaic.version = 11 : i64} {
  func.func @_fused_kernel(%arg0: i32, %arg1: memref<1x32x1024xf32, #tpu.memory_space<vmem>>, %arg2: memref<32x8xf32, #tpu.memory_space<vmem>>, %arg3: memref<8x32xf32, #tpu.memory_space<vmem>>, %arg4: memref<1x32x1024xf32, #tpu.memory_space<vmem>>, %arg5: memref<1x32x1xf32, #tpu.memory_space<vmem>>) attributes {dimension_semantics = [#tpu.dimension_semantics<parallel>], iteration_bounds = array<i64: 2>, scalar_prefetch = 0 : i64, scratch_operands = 0 : i64, tpu.core_type = #tpu.core_type<tc>, window_params = [{transform_indices = @transform_0, window_bounds = array<i64: 1, 32, 1024>}, {pipeline_mode = #tpu.pipeline_mode<synchronous>, transform_indices = @transform_1, window_bounds = array<i64: 32, 8>}, {pipeline_mode = #tpu.pipeline_mode<synchronous>, transform_indices = @transform_2, window_bounds = array<i64: 8, 32>}, {transform_indices = @transform_3, window_bounds = array<i64: 1, 32, 1024>}, {transform_indices = @transform_4, window_bounds = array<i64: 1, 32, 1>}]} {
    %c0 = arith.constant 0 : index
    %c0_0 = arith.constant 0 : index
    %c0_1 = arith.constant 0 : index
    %0 = vector.load %arg1[%c0, %c0_0, %c0_1] : memref<1x32x1024xf32, #tpu.memory_space<vmem>>, vector<1x32x1024xf32>
    %cst = arith.constant dense<0.000000e+00> : vector<1x32xf32>
    %1 = vector.multi_reduction <add>, %0, %cst [2] : vector<1x32x1024xf32> to vector<1x32xf32>
    %cst_2 = arith.constant 9.765625E-4 : f32
    %2 = vector.broadcast %cst_2 : f32 to vector<1x32xf32>
    %3 = arith.mulf %1, %2 : vector<1x32xf32>
    %c0_3 = arith.constant 0 : index
    %c0_4 = arith.constant 0 : index
    %4 = vector.load %arg2[%c0_3, %c0_4] : memref<32x8xf32, #tpu.memory_space<vmem>>, vector<32x8xf32>
    %cst_5 = arith.constant dense<0.000000e+00> : vector<1x8xf32>
    %5 = tpu.matmul %3, %4, %cst_5 {dimension_numbers = #tpu.dot_dimension_numbers<[1], [0], [0], [1], [0, 0, 1, 1], [], []>} : vector<1x32xf32>, vector<32x8xf32>, vector<1x8xf32> -> vector<1x8xf32>
    %cst_6 = arith.constant 0.000000e+00 : f32
    %6 = vector.broadcast %cst_6 : f32 to vector<1x8xf32>
    %7 = arith.maximumf %5, %6 : vector<1x8xf32>
    %c0_7 = arith.constant 0 : index
    %c0_8 = arith.constant 0 : index
    %8 = vector.load %arg3[%c0_7, %c0_8] : memref<8x32xf32, #tpu.memory_space<vmem>>, vector<8x32xf32>
    %cst_9 = arith.constant dense<0.000000e+00> : vector<1x32xf32>
    %9 = tpu.matmul %7, %8, %cst_9 {dimension_numbers = #tpu.dot_dimension_numbers<[1], [0], [0], [1], [0, 0, 1, 1], [], []>} : vector<1x8xf32>, vector<8x32xf32>, vector<1x32xf32> -> vector<1x32xf32>
    %10 = arith.negf %9 : vector<1x32xf32>
    %11 = math.exp %10 : vector<1x32xf32>
    %cst_10 = arith.constant 1.000000e+00 : f32
    %12 = vector.broadcast %cst_10 : f32 to vector<1x32xf32>
    %13 = arith.addf %12, %11 : vector<1x32xf32>
    %14 = arith.divf %12, %13 : vector<1x32xf32>
    %15 = vector.shape_cast %14 : vector<1x32xf32> to vector<1x32x1xf32>
    %c0_11 = arith.constant 0 : index
    %c0_12 = arith.constant 0 : index
    %c0_13 = arith.constant 0 : index
    %16 = vector.load %arg5[%c0_11, %c0_12, %c0_13] : memref<1x32x1xf32, #tpu.memory_space<vmem>>, vector<1x32x1xf32>
    tpu.vector_store %arg5[%c0_11, %c0_12, %c0_13], %15 {strides = array<i32>} : memref<1x32x1xf32, #tpu.memory_space<vmem>>, vector<1x32x1xf32>,
    %17 = vector.shape_cast %14 : vector<1x32xf32> to vector<1x32x1xf32>
    %18 = vector.broadcast %17 : vector<1x32x1xf32> to vector<1x32x1024xf32>
    %19 = arith.mulf %0, %18 : vector<1x32x1024xf32>
    %c0_14 = arith.constant 0 : index
    %c0_15 = arith.constant 0 : index
    %c0_16 = arith.constant 0 : index
    %20 = vector.load %arg4[%c0_14, %c0_15, %c0_16] : memref<1x32x1024xf32, #tpu.memory_space<vmem>>, vector<1x32x1024xf32>
    tpu.vector_store %arg4[%c0_14, %c0_15, %c0_16], %19 {strides = array<i32>} : memref<1x32x1024xf32, #tpu.memory_space<vmem>>, vector<1x32x1024xf32>,
    return
  }
  func.func @transform_0(%arg0: i32) -> (i32, i32, i32) {
    %c0_i32 = arith.constant 0 : i32
    %c0_i32_0 = arith.constant 0 : i32
    %c0_i32_1 = arith.constant 0 : i32
    return %arg0, %c0_i32, %c0_i32_0 : i32, i32, i32
  }
  func.func @transform_1(%arg0: i32) -> (i32, i32) {
    %c0_i32 = arith.constant 0 : i32
    %c0_i32_0 = arith.constant 0 : i32
    %c0_i32_1 = arith.constant 0 : i32
    return %c0_i32, %c0_i32_0 : i32, i32
  }
  func.func @transform_2(%arg0: i32) -> (i32, i32) {
    %c0_i32 = arith.constant 0 : i32
    %c0_i32_0 = arith.constant 0 : i32
    %c0_i32_1 = arith.constant 0 : i32
    return %c0_i32, %c0_i32_0 : i32, i32
  }
  func.func @transform_3(%arg0: i32) -> (i32, i32, i32) {
    %c0_i32 = arith.constant 0 : i32
    %c0_i32_0 = arith.constant 0 : i32
    %c0_i32_1 = arith.constant 0 : i32
    return %arg0, %c0_i32, %c0_i32_0 : i32, i32, i32
  }
  func.func @transform_4(%arg0: i32) -> (i32, i32, i32) {
    %c0_i32 = arith.constant 0 : i32
    %c0_i32_0 = arith.constant 0 : i32
    %c0_i32_1 = arith.constant 0 : i32
    return %arg0, %c0_i32, %c0_i32_0 : i32, i32, i32
  }
}

</mosaic_0001>

<llo_original>
// kernel: tpu_custom_call.1
$region0: #{tpu_custom_call.1}
  #allocation0 [shape = 'u32[]', space=smem, size = 0x4, offset = 0x4, fixed_abs, tag = 'smem constant byte address 0x4 - core index']
  #allocation1 [shape = 'u32[144,128]{1,0:T(1,128)}', space=vmem, size = 0x12000, scoped, tag = 'internal scratch']
  %s0 = inlined_call_operand.hbm [shape: f32[2,32,1024], index: 0, kind: input, shape index: {}]
  %s1 = inlined_call_operand.vmem [shape: f32[32,8], index: 1, kind: input, shape index: {}]
  %s2 = inlined_call_operand.vmem [shape: f32[8,32], index: 2, kind: input, shape index: {}]
  %s3 = inlined_call_operand.hbm [shape: f32[2,32,1024], index: 3, kind: output, shape index: {0}]
  %s4 = inlined_call_operand.vmem [shape: f32[2,32,1], index: 4, kind: output, shape index: {1}]
  %5 = xla_tuple %s3, %s4
  %s6 = sld [smem:[#allocation0]]
  $region57: #{tpu_custom_call.1} parent=0
    _
  %s8 = ssub.s32 1, %s6
  %s9 = scalar_select 0, %s8, %s6
  $region1: #{tpu_custom_call.1} parent=0
    #allocation2 [shape = 'u8[262144]{0}', space=vmem, size = 0x40000, scoped, tag = 'input window, operand 0']
    #allocation3 [shape = 's32[2]{0}', space=sflag, size = 0x8, scoped, tag = 'scoped memory for tpu_custom_call.1']
    #allocation4 [shape = 's32[2]{0}', space=sflag, size = 0x8, scoped, tag = 'scoped memory for tpu_custom_call.1']
    #allocation5 [shape = 'u8[262144]{0}', space=vmem, size = 0x40000, scoped, tag = 'output window, operand 0']
    %10 = vsyncpa [#allocation3], 0
    %s11 = scalar_lea.sflag [#allocation3], 1
    %12 = vsyncpa %s11, 0
    %13 = vsyncpa [#allocation4], 0
    %s14 = scalar_lea.sflag [#allocation4], 1
    %15 = vsyncpa %s14, 0
    loop: start=0, step=1, limit=4
    $region2: #{tpu_custom_call.1} parent=1 // loop_pre_header
      _
    $region3: #{tpu_custom_call.1} parent=1 // loop_header
      %s17 = sphi 0, %s21
      %p18 = scmp.ge.s32.totalorder %s17, 4
      %s27 = sphi 0, %s29
      %s30 = sphi 0, %s27
      %s31 = sphi 0, %s30
      %s47 = sphi 0, %s31
      %s51 = sphi 0, %s51
      %s53 = sphi 0, %s51
      %s54 = sphi 0, %s53
      %s68 = sphi 0, %s54
      %s72 = sphi 0, %s72
      %s74 = sphi 0, %s72
      %s75 = sphi 0, %s74
      %s89 = sphi 0, %s75
      %s95 = sphi 0, %s97
      %s98 = sphi 0, %s95
      %s99 = sphi 0, %s98
      %s115 = sphi 0, %s99
      %s121 = sphi 0, %s123
      %s124 = sphi 0, %s121
      %s125 = sphi 0, %s124
      %s141 = sphi 0, %s125
    $region4: #{tpu_custom_call.1} parent=1 // loop_header_branch
      %20 = sbr.rel (%p18) target = $region8
    $region5: #{tpu_custom_call.1} parent=1 // loop_body
      %s22 = ssub.s32 %s17, 1
      %s23 = ssub.s32 %s17, 2
      %s24 = sadd.s32 %s17, 1
      %s25 = ssub.s32 %s17, %s24
      %p26 = scmp.eq.s32.totalorder %s25, 0
      %s28 = sadd.s32 %s27, 1
      %s29 = scalar_select %p26, %s27, %s28
      %p32 = pneg %p26
      %p33 = scmp.eq.s32.totalorder %s17, 1
      %p34 = por %p32, %p33
      %p35 = scmp.ne.s32.totalorder %s27, %s30
      %p36 = scmp.eq.s32.totalorder %s17, 0
      %p37 = por %p35, %p36
      %p38 = scmp.ne.s32.totalorder %s27, %s30
      %p39 = scmp.eq.s32.totalorder %s22, 1
      %p40 = por %p38, %p39
      %p41 = scmp.ne.s32.totalorder %s30, %s31
      %p42 = scmp.eq.s32.totalorder %s22, 0
      %p43 = por %p41, %p42
      %p44 = scmp.ne.s32.totalorder %s30, %s31
      %p45 = scmp.eq.s32.totalorder %s23, 1
      %p46 = por %p44, %p45
      %p48 = scmp.ne.s32.totalorder %s31, %s47
      %p49 = scmp.eq.s32.totalorder %s23, 0
      %p50 = por %p48, %p49
      %s52 = sadd.s32 %s51, 1
      %p55 = scmp.eq.s32.totalorder %s17, 1
      %p56 = scmp.ne.s32.totalorder %s51, %s53
      %p57 = scmp.eq.s32.totalorder %s17, 0
      %p58 = por %p56, %p57
      %p59 = scmp.ne.s32.totalorder %s51, %s53
      %p60 = scmp.eq.s32.totalorder %s22, 1
      %p61 = por %p59, %p60
      %p62 = scmp.ne.s32.totalorder %s53, %s54
      %p63 = scmp.eq.s32.totalorder %s22, 0
      %p64 = por %p62, %p63
      %p65 = scmp.ne.s32.totalorder %s53, %s54
      %p66 = scmp.eq.s32.totalorder %s23, 1
      %p67 = por %p65, %p66
      %p69 = scmp.ne.s32.totalorder %s54, %s68
      %p70 = scmp.eq.s32.totalorder %s23, 0
      %p71 = por %p69, %p70
      %s73 = sadd.s32 %s72, 1
      %p76 = scmp.eq.s32.totalorder %s17, 1
      %p77 = scmp.ne.s32.totalorder %s72, %s74
      %p78 = scmp.eq.s32.totalorder %s17, 0
      %p79 = por %p77, %p78
      %p80 = scmp.ne.s32.totalorder %s72, %s74
      %p81 = scmp.eq.s32.totalorder %s22, 1
      %p82 = por %p80, %p81
      %p83 = scmp.ne.s32.totalorder %s74, %s75
      %p84 = scmp.eq.s32.totalorder %s22, 0
      %p85 = por %p83, %p84
      %p86 = scmp.ne.s32.totalorder %s74, %s75
      %p87 = scmp.eq.s32.totalorder %s23, 1
      %p88 = por %p86, %p87
      %p90 = scmp.ne.s32.totalorder %s75, %s89
      %p91 = scmp.eq.s32.totalorder %s23, 0
      %p92 = por %p90, %p91
      %s93 = ssub.s32 %s17, %s24
      %p94 = scmp.eq.s32.totalorder %s93, 0
      %s96 = sadd.s32 %s95, 1
      %s97 = scalar_select %p94, %s95, %s96
      %p100 = pneg %p94
      %p101 = scmp.eq.s32.totalorder %s17, 1
      %p102 = por %p100, %p101
      %p103 = scmp.ne.s32.totalorder %s95, %s98
      %p104 = scmp.eq.s32.totalorder %s17, 0
      %p105 = por %p103, %p104
      %p106 = scmp.ne.s32.totalorder %s95, %s98
      %p107 = scmp.eq.s32.totalorder %s22, 1
      %p108 = por %p106, %p107
      %p109 = scmp.ne.s32.totalorder %s98, %s99
      %p110 = scmp.eq.s32.totalorder %s22, 0
      %p111 = por %p109, %p110
      %p112 = scmp.ne.s32.totalorder %s98, %s99
      %p113 = scmp.eq.s32.totalorder %s23, 1
      %p114 = por %p112, %p113
      %p116 = scmp.ne.s32.totalorder %s99, %s115
      %p117 = scmp.eq.s32.totalorder %s23, 0
      %p118 = por %p116, %p117
      %s119 = ssub.s32 %s17, %s24
      %p120 = scmp.eq.s32.totalorder %s119, 0
      %s122 = sadd.s32 %s121, 1
      %s123 = scalar_select %p120, %s121, %s122
      %p126 = pneg %p120
      %p127 = scmp.eq.s32.totalorder %s17, 1
      %p128 = por %p126, %p127
      %p129 = scmp.ne.s32.totalorder %s121, %s124
      %p130 = scmp.eq.s32.totalorder %s17, 0
      %p131 = por %p129, %p130
      %p132 = scmp.ne.s32.totalorder %s121, %s124
      %p133 = scmp.eq.s32.totalorder %s22, 1
      %p134 = por %p132, %p133
      %p135 = scmp.ne.s32.totalorder %s124, %s125
      %p136 = scmp.eq.s32.totalorder %s22, 0
      %p137 = por %p135, %p136
      %p138 = scmp.ne.s32.totalorder %s124, %s125
      %p139 = scmp.eq.s32.totalorder %s23, 1
      %p140 = por %p138, %p139
      %p142 = scmp.ne.s32.totalorder %s125, %s141
      %p143 = scmp.eq.s32.totalorder %s23, 0
      %p144 = por %p142, %p143
      %p145 = scmp.le.s32.totalorder 1, %s17
      %p146 = scmp.lt.s32.totalorder %s17, 3
      %p147 = pnand %p145, %p146
      %p148 = pneg %p147
      // Predicated region
      $region9: #{tpu_custom_call.1} parent=5 // pred_check
        _
      $region10: #{tpu_custom_call.1} parent=5 // pred_check_branch
        %150 = sbr.rel (%p147) target = $region12
      $region11: #{tpu_custom_call.1} parent=5 // pred_region
        %s151 = ssub.s32 %s17, 1
        // Predicated region
        $region13: #{tpu_custom_call.1} parent=11 // pred_check
          %p152 = pneg %p64
        $region14: #{tpu_custom_call.1} parent=11 // pred_check_branch
          %154 = sbr.rel (%p152) target = $region16
        $region15: #{tpu_custom_call.1} parent=11 // pred_region
          _
        $region16: #{tpu_custom_call.1} parent=11 // pred_fallthru
          _
        // Predicated region
        $region17: #{tpu_custom_call.1} parent=11 // pred_check
          %p155 = pneg %p85
        $region18: #{tpu_custom_call.1} parent=11 // pred_check_branch
          %157 = sbr.rel (%p155) target = $region20
        $region19: #{tpu_custom_call.1} parent=11 // pred_region
          _
        $region20: #{tpu_custom_call.1} parent=11 // pred_fallthru
          _
      $region12: #{tpu_custom_call.1} parent=5 // pred_fallthru
        _
      %p158 = scmp.lt.s32.totalorder %s17, 2
      // Predicated region
      $region21: #{tpu_custom_call.1} parent=5 // pred_check
        %p159 = pneg %p158
      $region22: #{tpu_custom_call.1} parent=5 // pred_check_branch
        %161 = sbr.rel (%p159) target = $region24
      $region23: #{tpu_custom_call.1} parent=5 // pred_region
        // Predicated region
        $region25: #{tpu_custom_call.1} parent=23 // pred_check
          %p162 = pneg %p37
        $region26: #{tpu_custom_call.1} parent=23 // pred_check_branch
          %164 = sbr.rel (%p162) target = $region28
        $region27: #{tpu_custom_call.1} parent=23 // pred_region
          %s165 = sand.u32 %s27, 1
          %s166 = scalar_lea.sflag [#allocation3], %s165
          %s167 = sand.u32 %s27, 1
          %s168 = smul.addr %s167, 256
          %s169 = scalar_lea.vmem [#allocation2], %s168
          %s171 = ssub.s32 4096, 4096
          %172 = vsyncadd %s166, %s171
          %s173 = smul.addr %s17, 32
          %s174 = smul.addr %s173, 128
          %s175 = scalar_lea.hbm %s0, %s174
          %s176 = sshll.u32 %s169, 4
          %s177 = int_to_ptr.vmem [resolvable:$true] %s176
          %182 = dma.hbm_to_vmem [thread:$0]  %s175, 4096, %s177, %s166, 1024, 1024, 64
        $region28: #{tpu_custom_call.1} parent=23 // pred_fallthru
          _
      $region24: #{tpu_custom_call.1} parent=5 // pred_fallthru
        _
      %p183 = scmp.le.s32.totalorder 1, %s17
      %p184 = scmp.lt.s32.totalorder %s17, 3
      %p185 = pnand %p183, %p184
      %p186 = pneg %p185
      // Predicated region
      $region29: #{tpu_custom_call.1} parent=5 // pred_check
        _
      $region30: #{tpu_custom_call.1} parent=5 // pred_check_branch
        %188 = sbr.rel (%p185) target = $region32
      $region31: #{tpu_custom_call.1} parent=5 // pred_region
        %s189 = ssub.s32 %s17, 1
        %s190 = sand.u32 %s30, 1
        %s191 = scalar_lea.sflag [#allocation3], %s190
        %s192 = sand.u32 %s30, 1
        %s193 = smul.addr %s192, 256
        %s194 = scalar_lea.vmem [#allocation2], %s193
        // Predicated region
        $region33: #{tpu_custom_call.1} parent=31 // pred_check
          %p195 = pneg %p43
        $region34: #{tpu_custom_call.1} parent=31 // pred_check_branch
          %197 = sbr.rel (%p195) target = $region36
        $region35: #{tpu_custom_call.1} parent=31 // pred_region
          %198 = dma.done %s191, 4096
        $region36: #{tpu_custom_call.1} parent=31 // pred_fallthru
          _
        %s199 = sand.u32 %s30, 1
        %s200 = scalar_lea.sflag [#allocation3], %s199
        %s201 = sand.u32 %s30, 1
        %s202 = smul.addr %s201, 256
        %s203 = scalar_lea.vmem [#allocation2], %s202
        %p204 = pneg %p43
        %p205 = pneg %p40
        %p206 = pneg %p64
        %p207 = pneg %p61
        %p208 = pneg %p85
        %p209 = pneg %p82
        %p210 = pneg %p111
        %p211 = pneg %p108
        %s212 = sand.u32 %s98, 1
        %s213 = scalar_lea.sflag [#allocation4], %s212
        %s214 = sand.u32 %s98, 1
        %s215 = smul.addr %s214, 256
        %s216 = scalar_lea.vmem [#allocation5], %s215
        %p217 = pneg %p137
        %p218 = pneg %p134
        %p219 = scmp.lt.s32.totalorder %s22, 1
        %s220 = scalar_select %p219, %s22, 1
        %s221 = smul.addr %s220, 4
        %s222 = smul.addr %s221, 8
        %s223 = scalar_lea.vmem %s4, %s222
        %p224 = scmp.lt.s32.totalorder %s22, 1
        %s225 = scalar_select %p224, %s22, 1
        %s226 = smul.addr %s225, 4
        %s227 = smul.addr %s226, 8
        %s228 = scalar_lea.vmem %s4, %s227
        %v229 = vld [vmem:[%s194] sm:$0xff]
        %v230 = vld [vmem:[%s194 + $0x8] sm:$0xff]
        %v231 = vld [vmem:[%s194 + $0x10] sm:$0xff]
        %v232 = vld [vmem:[%s194 + $0x18] sm:$0xff]
        %v233 = vld [vmem:[%s194 + $0x20] sm:$0xff]
        %v234 = vld [vmem:[%s194 + $0x28] sm:$0xff]
        %v235 = vld [vmem:[%s194 + $0x30] sm:$0xff]
        %v236 = vld [vmem:[%s194 + $0x38] sm:$0xff]
        %v237 = vld [vmem:[%s194 + $0x40] sm:$0xff]
        %v238 = vld [vmem:[%s194 + $0x48] sm:$0xff]
        %v239 = vld [vmem:[%s194 + $0x50] sm:$0xff]
        %v240 = vld [vmem:[%s194 + $0x58] sm:$0xff]
        %v241 = vld [vmem:[%s194 + $0x60] sm:$0xff]
        %v242 = vld [vmem:[%s194 + $0x68] sm:$0xff]
        %v243 = vld [vmem:[%s194 + $0x70] sm:$0xff]
        %v244 = vld [vmem:[%s194 + $0x78] sm:$0xff]
        %v245 = vld [vmem:[%s194 + $0x80] sm:$0xff]
        %v246 = vld [vmem:[%s194 + $0x88] sm:$0xff]
        %v247 = vld [vmem:[%s194 + $0x90] sm:$0xff]
        %v248 = vld [vmem:[%s194 + $0x98] sm:$0xff]
        %v249 = vld [vmem:[%s194 + $0xa0] sm:$0xff]
        %v250 = vld [vmem:[%s194 + $0xa8] sm:$0xff]
        %v251 = vld [vmem:[%s194 + $0xb0] sm:$0xff]
        %v252 = vld [vmem:[%s194 + $0xb8] sm:$0xff]
        %v253 = vld [vmem:[%s194 + $0xc0] sm:$0xff]
        %v254 = vld [vmem:[%s194 + $0xc8] sm:$0xff]
        %v255 = vld [vmem:[%s194 + $0xd0] sm:$0xff]
        %v256 = vld [vmem:[%s194 + $0xd8] sm:$0xff]
        %v257 = vld [vmem:[%s194 + $0xe0] sm:$0xff]
        %v258 = vld [vmem:[%s194 + $0xe8] sm:$0xff]
        %v259 = vld [vmem:[%s194 + $0xf0] sm:$0xff]
        %v260 = vld [vmem:[%s194 + $0xf8] sm:$0xff]
        %v261 = vadd.f32 %v229, %v230
        %v262 = vadd.f32 %v261, %v231
        %v263 = vadd.f32 %v262, %v232
        %v264 = vadd.f32 %v263, %v233
        %v265 = vadd.f32 %v264, %v234
        %v266 = vadd.f32 %v265, %v235
        %v267 = vadd.f32 %v266, %v236
        %268 = vadd.xlane.f32.xlu0 %v267
        %v269 = vpop.xlane.xlu0 %268
        %v270 = vadd.f32 %v237, %v238
        %v271 = vadd.f32 %v270, %v239
        %v272 = vadd.f32 %v271, %v240
        %v273 = vadd.f32 %v272, %v241
        %v274 = vadd.f32 %v273, %v242
        %v275 = vadd.f32 %v274, %v243
        %v276 = vadd.f32 %v275, %v244
        %277 = vadd.xlane.f32.xlu0 %v276
        %v278 = vpop.xlane.xlu0 %277
        %v279 = vadd.f32 %v245, %v246
        %v280 = vadd.f32 %v279, %v247
        %v281 = vadd.f32 %v280, %v248
        %v282 = vadd.f32 %v281, %v249
        %v283 = vadd.f32 %v282, %v250
        %v284 = vadd.f32 %v283, %v251
        %v285 = vadd.f32 %v284, %v252
        %286 = vadd.xlane.f32.xlu0 %v285
        %v287 = vpop.xlane.xlu0 %286
        %v288 = vadd.f32 %v253, %v254
        %v289 = vadd.f32 %v288, %v255
        %v290 = vadd.f32 %v289, %v256
        %v291 = vadd.f32 %v290, %v257
        %v292 = vadd.f32 %v291, %v258
        %v293 = vadd.f32 %v292, %v259
        %v294 = vadd.f32 %v293, %v260
        %295 = vadd.xlane.f32.xlu0 %v294
        %v296 = vpop.xlane.xlu0 %295
        %v297 = vmul.f32 %v269, 0.0009765625
        %v298 = vmul.f32 %v278, 0.0009765625
        %v299 = vmul.f32 %v287, 0.0009765625
        %v300 = vmul.f32 %v296, 0.0009765625
        %v301 = vld [vmem:[%s1] sm:$0xff]
        %v302 = vld [vmem:[%s1 + $0x8] sm:$0xff]
        %v303 = vld [vmem:[%s1 + $0x10] sm:$0xff]
        %v304 = vld [vmem:[%s1 + $0x18] sm:$0xff]
        %v309 = vlaneseq
        %v310 = vand.u32 %v309, 127
        %v311 = vlaneseq
        %v312 = vshrl.u32 %v311, 7
        %v313 = vsub.s32 %v310, %v312
        %v314 = vrot.slane %v297, %v313
        %v315 = vadd.s32 %v310, 4294967288
        %v316 = vlaneseq
        %v317 = vshrl.u32 %v316, 7
        %v318 = vsub.s32 %v315, %v317
        %v319 = vrot.slane %v298, %v318
        %vm320 = vcmask 130112
        %v321 = vsel %vm320, %v319, %v314
        %v322 = vadd.s32 %v310, 4294967280
        %v323 = vlaneseq
        %v324 = vshrl.u32 %v323, 7
        %v325 = vsub.s32 %v322, %v324
        %v326 = vrot.slane %v299, %v325
        %vm327 = vcmask 195712
        %v328 = vsel %vm327, %v326, %v321
        %v329 = vadd.s32 %v310, 4294967272
        %v330 = vlaneseq
        %v331 = vshrl.u32 %v330, 7
        %v332 = vsub.s32 %v329, %v331
        %v333 = vrot.slane %v300, %v332
        %vm334 = vcmask 261312
        %v335 = vsel %vm334, %v333, %v328
        %vm336 = vcmask 261120
        %v337 = vsel %vm336, %v335, 0
        %339 = vmatprep.subr.mxu0 0.0
        %340 = vmatpush1.msra.mxu0 0.0
        %341 = vmatprep.subr.mxu0 0.0
        %342 = vmatpush1.msra.mxu0 0.0
        %343 = vmatprep.subr.mxu0 0.0
        %344 = vmatpush1.msra.mxu0 0.0
        %345 = vmatprep.subr.mxu0 0.0
        %346 = vmatpush1.msra.mxu0 0.0
        %347 = vmatprep.subr.mxu0 0.0
        %348 = vmatpush1.msra.mxu0 0.0
        %349 = vmatprep.subr.mxu0 0.0
        %350 = vmatpush1.msra.mxu0 0.0
        %351 = vmatprep.subr.mxu0 0.0
        %352 = vmatpush1.msra.mxu0 0.0
        %353 = vmatprep.subr.mxu0 0.0
        %354 = vmatpush1.msra.mxu0 0.0
        %355 = vmatprep.subr.mxu0 0.0
        %356 = vmatpush1.msra.mxu0 0.0
        %357 = vmatprep.subr.mxu0 0.0
        %358 = vmatpush1.msra.mxu0 0.0
        %359 = vmatprep.subr.mxu0 0.0
        %360 = vmatpush1.msra.mxu0 0.0
        %361 = vmatprep.subr.mxu0 0.0
        %362 = vmatpush1.msra.mxu0 0.0
        %363 = vmatprep.subr.mxu0 0.0
        %364 = vmatpush1.msra.mxu0 %v304
        %365 = vmatprep.subr.mxu0 0.0
        %366 = vmatpush1.msra.mxu0 %v303
        %367 = vmatprep.subr.mxu0 0.0
        %368 = vmatpush1.msra.mxu0 %v302
        %369 = vmatprep.subr.mxu0 0.0
        %370 = vmatpush1.msra.mxu0 %v301
        %371 = vmatprep.subr.mxu0 0.0
        %372 = vmatpush2.msra.mxu0 0.0
        %373 = vmatprep.subr.mxu0 0.0
        %374 = vmatpush2.msra.mxu0 0.0
        %375 = vmatprep.subr.mxu0 0.0
        %376 = vmatpush2.msra.mxu0 0.0
        %377 = vmatprep.subr.mxu0 0.0
        %378 = vmatpush2.msra.mxu0 0.0
        %379 = vmatprep.subr.mxu0 0.0
        %380 = vmatpush2.msra.mxu0 0.0
        %381 = vmatprep.subr.mxu0 0.0
        %382 = vmatpush2.msra.mxu0 0.0
        %383 = vmatprep.subr.mxu0 0.0
        %384 = vmatpush2.msra.mxu0 0.0
        %385 = vmatprep.subr.mxu0 0.0
        %386 = vmatpush2.msra.mxu0 0.0
        %387 = vmatprep.subr.mxu0 0.0
        %388 = vmatpush2.msra.mxu0 0.0
        %389 = vmatprep.subr.mxu0 0.0
        %390 = vmatpush2.msra.mxu0 0.0
        %391 = vmatprep.subr.mxu0 0.0
        %392 = vmatpush2.msra.mxu0 0.0
        %393 = vmatprep.subr.mxu0 0.0
        %394 = vmatpush2.msra.mxu0 0.0
        %395 = vmatprep.subr.mxu0 0.0
        %396 = vmatpush2.msra.mxu0 0.0
        %397 = vmatprep.subr.mxu0 0.0
        %398 = vmatpush2.msra.mxu0 0.0
        %399 = vmatprep.subr.mxu0 0.0
        %400 = vmatpush2.msra.mxu0 0.0
        %401 = vmatprep.subr.mxu0 0.0
        %402 = vmatpush2.msra.mxu0 0.0
        %403 = vmatprep.mubr.f32.mxu0 0.0
        %404 = vmatmul.mubr.f32.gmra.mxu0 %v337
        %v405 = vpop.f32.mrf.mxu0
        %v406 = vadd.f32 0.0, %v405
        %v407 = vpop.f32.mrf.mxu0
        %408 = vdwg.mxu0
        %v409 = vmax.f32 %v406, 0.0
        %v410 = vld [vmem:[%s2] sm:$0xff]
        %vm411 = vcmask 64512
        %v413 = vsel %vm411, %v409, 0
        %415 = vmatprep.subr.mxu0 0.0
        %416 = vmatpush1.msra.mxu0 0.0
        %417 = vmatprep.subr.mxu0 0.0
        %418 = vmatpush1.msra.mxu0 0.0
        %419 = vmatprep.subr.mxu0 0.0
        %420 = vmatpush1.msra.mxu0 0.0
        %421 = vmatprep.subr.mxu0 0.0
        %422 = vmatpush1.msra.mxu0 0.0
        %423 = vmatprep.subr.mxu0 0.0
        %424 = vmatpush1.msra.mxu0 0.0
        %425 = vmatprep.subr.mxu0 0.0
        %426 = vmatpush1.msra.mxu0 0.0
        %427 = vmatprep.subr.mxu0 0.0
        %428 = vmatpush1.msra.mxu0 0.0
        %429 = vmatprep.subr.mxu0 0.0
        %430 = vmatpush1.msra.mxu0 0.0
        %431 = vmatprep.subr.mxu0 0.0
        %432 = vmatpush1.msra.mxu0 0.0
        %433 = vmatprep.subr.mxu0 0.0
        %434 = vmatpush1.msra.mxu0 0.0
        %435 = vmatprep.subr.mxu0 0.0
        %436 = vmatpush1.msra.mxu0 0.0
        %437 = vmatprep.subr.mxu0 0.0
        %438 = vmatpush1.msra.mxu0 0.0
        %439 = vmatprep.subr.mxu0 0.0
        %440 = vmatpush1.msra.mxu0 0.0
        %441 = vmatprep.subr.mxu0 0.0
        %442 = vmatpush1.msra.mxu0 0.0
        %443 = vmatprep.subr.mxu0 0.0
        %444 = vmatpush1.msra.mxu0 0.0
        %445 = vmatprep.subr.mxu0 0.0
        %446 = vmatpush1.msra.mxu0 %v410
        %447 = vmatprep.subr.mxu0 0.0
        %448 = vmatpush2.msra.mxu0 0.0
        %449 = vmatprep.subr.mxu0 0.0
        %450 = vmatpush2.msra.mxu0 0.0
        %451 = vmatprep.subr.mxu0 0.0
        %452 = vmatpush2.msra.mxu0 0.0
        %453 = vmatprep.subr.mxu0 0.0
        %454 = vmatpush2.msra.mxu0 0.0
        %455 = vmatprep.subr.mxu0 0.0
        %456 = vmatpush2.msra.mxu0 0.0
        %457 = vmatprep.subr.mxu0 0.0
        %458 = vmatpush2.msra.mxu0 0.0
        %459 = vmatprep.subr.mxu0 0.0
        %460 = vmatpush2.msra.mxu0 0.0
        %461 = vmatprep.subr.mxu0 0.0
        %462 = vmatpush2.msra.mxu0 0.0
        %463 = vmatprep.subr.mxu0 0.0
        %464 = vmatpush2.msra.mxu0 0.0
        %465 = vmatprep.subr.mxu0 0.0
        %466 = vmatpush2.msra.mxu0 0.0
        %467 = vmatprep.subr.mxu0 0.0
        %468 = vmatpush2.msra.mxu0 0.0
        %469 = vmatprep.subr.mxu0 0.0
        %470 = vmatpush2.msra.mxu0 0.0
        %471 = vmatprep.subr.mxu0 0.0
        %472 = vmatpush2.msra.mxu0 0.0
        %473 = vmatprep.subr.mxu0 0.0
        %474 = vmatpush2.msra.mxu0 0.0
        %475 = vmatprep.subr.mxu0 0.0
        %476 = vmatpush2.msra.mxu0 0.0
        %477 = vmatprep.subr.mxu0 0.0
        %478 = vmatpush2.msra.mxu0 0.0
        %479 = vmatprep.mubr.f32.mxu0 0.0
        %480 = vmatmul.mubr.f32.gmra.mxu0 %v413
        %v481 = vpop.f32.mrf.mxu0
        %v482 = vadd.f32 0.0, %v481
        %v483 = vpop.f32.mrf.mxu0
        %484 = vdwg.mxu0
        %v485 = vxor.u32 %v482, 2147483648
        %v486 = vmul.f32 %v485, 1.442695
        %v487 = vpow.pop %v486
        %v488 = vadd.f32 %v487, 1.0
        %v489 = vrcp.pop %v488
        %v490 = vmul.f32 1.0, %v489
        %v491 = vlaneseq
        %v492 = vshrl.u32 %v491, 7
        %v493 = vsub.s32 0, %v492
        %v494 = vrot.slane %v490, %v493
        %496 = vbcast.lane.b32.xlu0 %v494, 256
        %v497 = vpop.permute.xlu0 %496
        %s499 = sor.u32 256, 8
        %500 = vbcast.lane.b32.xlu0 %v494, %s499
        %v501 = vpop.permute.xlu0 %500
        %s503 = sor.u32 256, 16
        %504 = vbcast.lane.b32.xlu0 %v494, %s503
        %v505 = vpop.permute.xlu0 %504
        %s507 = sor.u32 256, 24
        %508 = vbcast.lane.b32.xlu0 %v494, %s507
        %v509 = vpop.permute.xlu0 %508
        %vm510 = vcmask 7168
        %511 = vst.msk [vmem:[%s228] sm:$0xff] %vm510, %v497
        %512 = vst.msk [vmem:[%s228 + $0x8] sm:$0xff] %vm510, %v501
        %513 = vst.msk [vmem:[%s228 + $0x10] sm:$0xff] %vm510, %v505
        %514 = vst.msk [vmem:[%s228 + $0x18] sm:$0xff] %vm510, %v509
        %v515 = vmul.f32 %v229, %v497
        %v516 = vmul.f32 %v230, %v497
        %v517 = vmul.f32 %v231, %v497
        %v518 = vmul.f32 %v232, %v497
        %v519 = vmul.f32 %v233, %v497
        %v520 = vmul.f32 %v234, %v497
        %v521 = vmul.f32 %v235, %v497
        %v522 = vmul.f32 %v236, %v497
        %v523 = vmul.f32 %v237, %v501
        %v524 = vmul.f32 %v238, %v501
        %v525 = vmul.f32 %v239, %v501
        %v526 = vmul.f32 %v240, %v501
        %v527 = vmul.f32 %v241, %v501
        %v528 = vmul.f32 %v242, %v501
        %v529 = vmul.f32 %v243, %v501
        %v530 = vmul.f32 %v244, %v501
        %v531 = vmul.f32 %v245, %v505
        %v532 = vmul.f32 %v246, %v505
        %v533 = vmul.f32 %v247, %v505
        %v534 = vmul.f32 %v248, %v505
        %v535 = vmul.f32 %v249, %v505
        %v536 = vmul.f32 %v250, %v505
        %v537 = vmul.f32 %v251, %v505
        %v538 = vmul.f32 %v252, %v505
        %v539 = vmul.f32 %v253, %v509
        %v540 = vmul.f32 %v254, %v509
        %v541 = vmul.f32 %v255, %v509
        %v542 = vmul.f32 %v256, %v509
        %v543 = vmul.f32 %v257, %v509
        %v544 = vmul.f32 %v258, %v509
        %v545 = vmul.f32 %v259, %v509
        %v546 = vmul.f32 %v260, %v509
        %547 = vst [vmem:[%s216] sm:$0xff] %v515
        %548 = vst [vmem:[%s216 + $0x8] sm:$0xff] %v516
        %549 = vst [vmem:[%s216 + $0x10] sm:$0xff] %v517
        %550 = vst [vmem:[%s216 + $0x18] sm:$0xff] %v518
        %551 = vst [vmem:[%s216 + $0x20] sm:$0xff] %v519
        %552 = vst [vmem:[%s216 + $0x28] sm:$0xff] %v520
        %553 = vst [vmem:[%s216 + $0x30] sm:$0xff] %v521
        %554 = vst [vmem:[%s216 + $0x38] sm:$0xff] %v522
        %555 = vst [vmem:[%s216 + $0x40] sm:$0xff] %v523
        %556 = vst [vmem:[%s216 + $0x48] sm:$0xff] %v524
        %557 = vst [vmem:[%s216 + $0x50] sm:$0xff] %v525
        %558 = vst [vmem:[%s216 + $0x58] sm:$0xff] %v526
        %559 = vst [vmem:[%s216 + $0x60] sm:$0xff] %v527
        %560 = vst [vmem:[%s216 + $0x68] sm:$0xff] %v528
        %561 = vst [vmem:[%s216 + $0x70] sm:$0xff] %v529
        %562 = vst [vmem:[%s216 + $0x78] sm:$0xff] %v530
        %563 = vst [vmem:[%s216 + $0x80] sm:$0xff] %v531
        %564 = vst [vmem:[%s216 + $0x88] sm:$0xff] %v532
        %565 = vst [vmem:[%s216 + $0x90] sm:$0xff] %v533
        %566 = vst [vmem:[%s216 + $0x98] sm:$0xff] %v534
        %567 = vst [vmem:[%s216 + $0xa0] sm:$0xff] %v535
        %568 = vst [vmem:[%s216 + $0xa8] sm:$0xff] %v536
        %569 = vst [vmem:[%s216 + $0xb0] sm:$0xff] %v537
        %570 = vst [vmem:[%s216 + $0xb8] sm:$0xff] %v538
        %571 = vst [vmem:[%s216 + $0xc0] sm:$0xff] %v539
        %572 = vst [vmem:[%s216 + $0xc8] sm:$0xff] %v540
        %573 = vst [vmem:[%s216 + $0xd0] sm:$0xff] %v541
        %574 = vst [vmem:[%s216 + $0xd8] sm:$0xff] %v542
        %575 = vst [vmem:[%s216 + $0xe0] sm:$0xff] %v543
        %576 = vst [vmem:[%s216 + $0xe8] sm:$0xff] %v544
        %577 = vst [vmem:[%s216 + $0xf0] sm:$0xff] %v545
        %578 = vst [vmem:[%s216 + $0xf8] sm:$0xff] %v546
        %s579 = sand.u32 %s98, 1
        %s580 = scalar_lea.sflag [#allocation4], %s579
        %s581 = sand.u32 %s98, 1
        %s582 = smul.addr %s581, 256
        %s583 = scalar_lea.vmem [#allocation5], %s582
        %p584 = scmp.lt.s32.totalorder %s22, 1
        %s585 = scalar_select %p584, %s22, 1
        %s586 = smul.addr %s585, 4
        %s587 = smul.addr %s586, 8
        %s588 = scalar_lea.vmem %s4, %s587
        // Predicated region
        $region37: #{tpu_custom_call.1} parent=31 // pred_check
          %p589 = pneg %p108
        $region38: #{tpu_custom_call.1} parent=31 // pred_check_branch
          %591 = sbr.rel (%p589) target = $region40
        $region39: #{tpu_custom_call.1} parent=31 // pred_region
          %s593 = ssub.s32 4096, 4096
          %594 = vsyncadd %s580, %s593
          %s595 = smul.addr %s22, 32
          %s596 = smul.addr %s595, 128
          %s597 = scalar_lea.hbm %s3, %s596
          %s598 = sshll.u32 %s583, 4
          %s599 = int_to_ptr.vmem [resolvable:$true] %s598
          %604 = dma.vmem_to_hbm [thread:$0]  %s599, 4096, %s597, %s580, 1024, 1024, 64
        $region40: #{tpu_custom_call.1} parent=31 // pred_fallthru
          _
        // Predicated region
        $region41: #{tpu_custom_call.1} parent=31 // pred_check
          %p605 = pneg %p134
        $region42: #{tpu_custom_call.1} parent=31 // pred_check_branch
          %607 = sbr.rel (%p605) target = $region44
        $region43: #{tpu_custom_call.1} parent=31 // pred_region
          _
        $region44: #{tpu_custom_call.1} parent=31 // pred_fallthru
          _
      $region32: #{tpu_custom_call.1} parent=5 // pred_fallthru
        _
      %p608 = scmp.le.s32.totalorder 2, %s17
      // Predicated region
      $region45: #{tpu_custom_call.1} parent=5 // pred_check
        %p609 = pneg %p608
      $region46: #{tpu_custom_call.1} parent=5 // pred_check_branch
        %611 = sbr.rel (%p609) target = $region48
      $region47: #{tpu_custom_call.1} parent=5 // pred_region
        %s612 = ssub.s32 %s17, 2
        // Predicated region
        $region49: #{tpu_custom_call.1} parent=47 // pred_check
          %p613 = pneg %p114
        $region50: #{tpu_custom_call.1} parent=47 // pred_check_branch
          %615 = sbr.rel (%p613) target = $region52
        $region51: #{tpu_custom_call.1} parent=47 // pred_region
          %s616 = sand.u32 %s99, 1
          %s617 = scalar_lea.sflag [#allocation4], %s616
          %s618 = sand.u32 %s99, 1
          %s619 = smul.addr %s618, 256
          %s620 = scalar_lea.vmem [#allocation5], %s619
          %621 = dma.done %s617, 4096
        $region52: #{tpu_custom_call.1} parent=47 // pred_fallthru
          _
        // Predicated region
        $region53: #{tpu_custom_call.1} parent=47 // pred_check
          %p622 = pneg %p140
        $region54: #{tpu_custom_call.1} parent=47 // pred_check_branch
          %624 = sbr.rel (%p622) target = $region56
        $region55: #{tpu_custom_call.1} parent=47 // pred_region
          %p625 = scmp.lt.s32.totalorder %s23, 1
          %s626 = scalar_select %p625, %s23, 1
          %s627 = smul.addr %s626, 4
          %s628 = smul.addr %s627, 8
          %s629 = scalar_lea.vmem %s4, %s628
        $region56: #{tpu_custom_call.1} parent=47 // pred_fallthru
          _
      $region48: #{tpu_custom_call.1} parent=5 // pred_fallthru
        _
    $region6: #{tpu_custom_call.1} parent=1 // loop_footer
      %s21 = sadd.s32 1, %s17
    $region7: #{tpu_custom_call.1} parent=1 // loop_footer_branch
      %16 = sbr.rel target = $region3
    $region8: #{tpu_custom_call.1} parent=1 // loop_exit
      _
    %630 = vsyncpa [#allocation3], 1
    %s631 = scalar_lea.sflag [#allocation3], 1
    %632 = vsyncpa %s631, 1
    %633 = vsyncpa [#allocation4], 1
    %s634 = scalar_lea.sflag [#allocation4], 1
    %635 = vsyncpa %s634, 1

</llo_original>
